<compile_context>
chip_gen: v6e
topology: v6e:2x2x1
jax: 0.10.0
libtpu: 0.0.40
codegen_flags: <defaults>
</compile_context>

<pallas_src>
import functools
import math

import jax
import jax.numpy as jnp
from jax.experimental import pallas as pl
from jax.experimental.pallas import tpu as pltpu


# ---------------------------------------------------------------------------
# Kernels
# ---------------------------------------------------------------------------
def _td_linear_kernel_single_k(x_ref, w_ref, b_ref, o_ref):
    """Whole reduction in one tile: o = x @ w + b (no scratch, no branches)."""
    o_ref[...] = (
        jnp.dot(x_ref[...], w_ref[...], preferred_element_type=jnp.float32)
        + b_ref[...]
    ).astype(o_ref.dtype)


def _td_linear_kernel_ktiled_f32out(x_ref, w_ref, b_ref, o_ref):
    """K-tiled, f32 output: accumulate directly into the resident output block."""
    k = pl.program_id(2)

    @pl.when(k == 0)
    def _init():
        o_ref[...] = jnp.broadcast_to(b_ref[...], o_ref.shape)

    o_ref[...] += jnp.dot(
        x_ref[...], w_ref[...], preferred_element_type=jnp.float32
    )


def _td_linear_kernel_ktiled_acc(x_ref, w_ref, b_ref, o_ref, acc_ref):
    """K-tiled, narrow output: f32 VMEM accumulator, bias folded into the init."""
    k = pl.program_id(2)

    @pl.when(k == 0)
    def _init():
        acc_ref[...] = jnp.broadcast_to(b_ref[...], acc_ref.shape)

    acc_ref[...] += jnp.dot(
        x_ref[...], w_ref[...], preferred_element_type=jnp.float32
    )

    @pl.when(k == pl.num_programs(2) - 1)
    def _store():
        o_ref[...] = acc_ref[...].astype(o_ref.dtype)


# ---------------------------------------------------------------------------
# Wrapper helpers
# ---------------------------------------------------------------------------
def _round_up(x, m):
    return ((x + m - 1) // m) * m


def _pick_tile(dim, align, max_tile):
    """Aligned tile <= max_tile; prefer exact divisors of `dim` (no padding)."""
    max_tile = max((max_tile // align) * align, align)
    if dim <= max_tile:
        return _round_up(dim, align)
    t = max_tile
    floor = max(align, 128)
    while t >= floor:
        if dim % t == 0:
            return t
        t -= align
    return max_tile


def _vmem_budget_bytes():
    """Per-generation VMEM budget for a single grid step (with headroom)."""
    cap = 64 * 1024 * 1024  # safe default = v7x physical VMEM per TensorCore
    try:
        cap = int(getattr(pltpu.get_tpu_info(), "vmem_capacity_bytes", cap))
    except Exception:
        pass
    # Leave headroom for compiler-internal scratch; v7x -> ~40 MiB, v5e/v6e -> ~96 MiB.
    return max(32 * 1024 * 1024, min(cap - 24 * 1024 * 1024, 96 * 1024 * 1024))


# ---------------------------------------------------------------------------
# TimeDistributed(nn.Linear) forward
# ---------------------------------------------------------------------------
@functools.partial(
    jax.jit, static_argnames=("tm_max", "tn_max", "tk_max", "cast_to_bf16")
)
def time_distributed_linear(
    x, w, b, *, tm_max=1024, tn_max=512, tk_max=1024, cast_to_bf16=True
):
    """TimeDistributed(nn.Linear) forward.

    x: (batch, time, ..., F) -> (batch, time, ..., H);  w: (F, H);  b: (H,).
    All leading axes are folded into one M axis (Linear acts on the last axis,
    so this is exactly equivalent to the (batch*time, ...) fold in the spec).
    """
    assert x.ndim > 2, "TimeDistributed expects at least (batch, time, features)"
    lead = x.shape[:-1]
    F = x.shape[-1]
    H = w.shape[1]
    assert w.shape[0] == F and b.shape == (H,)
    M = 1
    for d in lead:
        M *= d
    out_dtype = x.dtype

    compute_dtype = jnp.bfloat16 if cast_to_bf16 else x.dtype
    in_itemsize = jnp.dtype(compute_dtype).itemsize
    out_itemsize = jnp.dtype(out_dtype).itemsize
    align_m = 16 if in_itemsize == 2 else 8  # sublane packing of the operand dtype

    # ---- tile selection -----------------------------------------------------
    # N (lane dim of w/out): 128-aligned, collapse to a single tile when small.
    tn = min(tn_max, _round_up(H, 128))
    Hp = _round_up(H, tn)
    # K (reduction): collapse to one tile whenever it fits -> no K grid axis.
    f_lane = _round_up(F, 128)
    if f_lane <= tk_max:
        tk = f_lane
    else:
        tk = (tk_max // 128) * 128
    Fp = _round_up(F, tk)
    k_blocks = Fp // tk
    # M: prefer a divisor of M so no padding / output slicing is needed.
    tm = _pick_tile(M, align_m, tm_max)

    # Shrink tiles if a pathological config would blow the per-step VMEM budget.
    needs_acc = (k_blocks > 1) and (jnp.dtype(out_dtype) != jnp.dtype(jnp.float32))

    def _tile_vmem(tm_, tn_, tk_):
        return (
            2 * tm_ * tk_ * in_itemsize       # x, double-buffered
            + 2 * tk_ * tn_ * in_itemsize     # w, double-buffered
            + 2 * tn_ * 4                     # bias (f32)
            + 2 * tm_ * tn_ * out_itemsize    # out, double-buffered
            + (tm_ * tn_ * 4 if needs_acc else 0)
        )

    budget = _vmem_budget_bytes()
    while _tile_vmem(tm, tn, tk) > budget and tm > 2 * align_m:
        tm = max(align_m, _round_up(tm // 2, align_m))
    while _tile_vmem(tm, tn, tk) > budget and tn > 256:
        tn = max(128, (tn // 2 // 128) * 128)
        Hp = _round_up(H, tn)

    Mp = _round_up(M, tm)
    m_blocks = Mp // tm
    n_blocks = Hp // tn

    # Keep >= 2 parallel blocks for non-tiny problems so both v7x TensorCores
    # get work (harmless single extra grid step on 1-TC v5e/v6e).
    if m_blocks * n_blocks == 1 and M >= 512:
        tm = _round_up((M + 1) // 2, align_m)
        Mp = _round_up(M, tm)
        m_blocks = Mp // tm

    # ---- HBM glue (kept minimal: pad only when a dim is not tile-aligned) ---
    x_flat = x.reshape(M, F).astype(compute_dtype)
    if (Mp, Fp) != (M, F):
        x_flat = jnp.pad(x_flat, ((0, Mp - M), (0, Fp - F)))
    w_p = w.astype(compute_dtype)
    if (Fp, Hp) != (F, H):
        w_p = jnp.pad(w_p, ((0, Fp - F), (0, Hp - H)))
    b_p = b.astype(jnp.float32).reshape(1, H)
    if Hp != H:
        b_p = jnp.pad(b_p, ((0, 0), (0, Hp - H)))

    # ---- cost estimate: count real revisit traffic --------------------------
    cost = pl.CostEstimate(
        flops=2 * Mp * Fp * Hp,
        bytes_accessed=(
            Mp * Fp * n_blocks * in_itemsize      # x re-read once per N tile
            + Fp * Hp * m_blocks * in_itemsize    # w re-read once per M tile
            + Mp * Hp * out_itemsize              # output written once
        ),
        transcendentals=0,
    )
    vmem_limit = int(
        min(budget, max(32 * 1024 * 1024, 2 * _tile_vmem(tm, tn, tk)))
    )

    # ---- grid / kernel dispatch ---------------------------------------------
    if k_blocks == 1:
        kernel = _td_linear_kernel_single_k
        grid = (m_blocks, n_blocks)
        in_specs = [
            pl.BlockSpec((tm, tk), lambda i, j: (i, 0)),
            # Weight / bias block index independent of i: reused for every row tile.
            pl.BlockSpec((tk, tn), lambda i, j: (0, j)),
            pl.BlockSpec((1, tn), lambda i, j: (0, j)),
        ]
        out_specs = pl.BlockSpec((tm, tn), lambda i, j: (i, j))
        scratch_shapes = []
        dim_sem = ("parallel", "parallel")
    else:
        grid = (m_blocks, n_blocks, k_blocks)
        in_specs = [
            pl.BlockSpec((tm, tk), lambda i, j, k: (i, k)),
            pl.BlockSpec((tk, tn), lambda i, j, k: (k, j)),
            pl.BlockSpec((1, tn), lambda i, j, k: (0, j)),
        ]
        out_specs = pl.BlockSpec((tm, tn), lambda i, j, k: (i, j))
        dim_sem = ("parallel", "parallel", "arbitrary")
        if needs_acc:
            kernel = _td_linear_kernel_ktiled_acc
            scratch_shapes = [pltpu.VMEM((tm, tn), jnp.float32)]
        else:
            kernel = _td_linear_kernel_ktiled_f32out
            scratch_shapes = []

    out_flat = pl.pallas_call(
        kernel,
        out_shape=jax.ShapeDtypeStruct((Mp, Hp), out_dtype),
        grid_spec=pltpu.PrefetchScalarGridSpec(
            num_scalar_prefetch=0,
            grid=grid,
            in_specs=in_specs,
            out_specs=out_specs,
            scratch_shapes=scratch_shapes,
        ),
        compiler_params=pltpu.CompilerParams(
            dimension_semantics=dim_sem,
            vmem_limit_bytes=vmem_limit,
        ),
        cost_estimate=cost,
    )(x_flat, w_p, b_p)

    if (Mp, Hp) != (M, H):
        out_flat = out_flat[:M, :H]
    return out_flat.reshape(*lead, H)


# ---------------------------------------------------------------------------
# Self-test
# ---------------------------------------------------------------------------
if __name__ == "__main__":
    key = jax.random.PRNGKey(0)
    ks = jax.random.split(key, 12)

    def ref_linear(x, w, b, cast):
        cd = jnp.bfloat16 if cast else x.dtype
        lead = x.shape[:-1]
        xf = x.reshape(-1, x.shape[-1]).astype(cd)
        y = jnp.dot(xf, w.astype(cd), preferred_element_type=jnp.float32)
        y = y + b.astype(jnp.float32)
        return y.astype(x.dtype).reshape(*lead, w.shape[1])

    # Test 1: canonical small TimeDistributed(Linear), bf16 collapsed-K fast path.
    B, T, F, H = 2, 8, 32, 64
    x = jax.random.normal(ks[0], (B, T, F), dtype=jnp.float32)
    w = jax.random.normal(ks[1], (F, H), dtype=jnp.float32) * (1.0 / math.sqrt(F))
    b = jax.random.normal(ks[2], (H,), dtype=jnp.float32) * 0.01
    out = jax.block_until_ready(time_distributed_linear(x, w, b))
    ref = ref_linear(x, w, b, cast=True)
    assert out.shape == (B, T, H)
    assert jnp.allclose(out, ref, atol=5e-3, rtol=5e-3), float(
        jnp.max(jnp.abs(out - ref))
    )

    # Test 2: K-tiled path, f32 operands, direct accumulation into the output,
    # divisor-friendly tm (no M padding), padded N/K edges.
    B2, T2, F2, H2 = 4, 90, 200, 200
    x2 = jax.random.normal(ks[3], (B2, T2, F2), dtype=jnp.float32)
    w2 = jax.random.normal(ks[4], (F2, H2), dtype=jnp.float32) * (1.0 / math.sqrt(F2))
    b2 = jax.random.normal(ks[5], (H2,), dtype=jnp.float32) * 0.01
    out2 = jax.block_until_ready(
        time_distributed_linear(
            x2, w2, b2, tm_max=128, tn_max=256, tk_max=128, cast_to_bf16=False
        )
    )
    ref2 = ref_linear(x2, w2, b2, cast=False)
    assert out2.shape == (B2, T2, H2)
    assert jnp.allclose(out2, ref2, atol=1e-4, rtol=1e-4), float(
        jnp.max(jnp.abs(out2 - ref2))
    )

    # Test 3: >3-D input (TimeDistributed over (B, T, S, F) with a Linear on F).
    B3, T3, S3, F3, H3 = 2, 3, 5, 32, 32
    x3 = jax.random.normal(ks[6], (B3, T3, S3, F3), dtype=jnp.float32)
    w3 = jax.random.normal(ks[7], (F3, H3), dtype=jnp.float32) * (1.0 / math.sqrt(F3))
    b3 = jax.random.normal(ks[8], (H3,), dtype=jnp.float32) * 0.01
    out3 = jax.block_until_ready(time_distributed_linear(x3, w3, b3))
    ref3 = ref_linear(x3, w3, b3, cast=True)
    assert out3.shape == (B3, T3, S3, H3)
    assert jnp.allclose(out3, ref3, atol=5e-3, rtol=5e-3), float(
        jnp.max(jnp.abs(out3 - ref3))
    )

    # Test 4: bf16 input/output with K tiling -> exercises the acc-scratch kernel.
    B4, T4, F4, H4 = 2, 16, 200, 200
    x4 = jax.random.normal(ks[9], (B4, T4, F4), dtype=jnp.float32).astype(jnp.bfloat16)
    w4 = (
        jax.random.normal(ks[10], (F4, H4), dtype=jnp.float32) * (1.0 / math.sqrt(F4))
    ).astype(jnp.bfloat16)
    b4 = (jax.random.normal(ks[11], (H4,), dtype=jnp.float32) * 0.01).astype(
        jnp.bfloat16
    )
    out4 = jax.block_until_ready(
        time_distributed_linear(x4, w4, b4, tk_max=128, cast_to_bf16=True)
    )
    ref4 = ref_linear(x4, w4, b4, cast=True)
    assert out4.shape == (B4, T4, H4)
    assert jnp.allclose(
        out4.astype(jnp.float32), ref4.astype(jnp.float32), atol=3e-2, rtol=3e-2
    ), float(jnp.max(jnp.abs(out4.astype(jnp.float32) - ref4.astype(jnp.float32))))

    # TODO(synk): TimeDistributed wraps an arbitrary nn.Module; only the Linear
    # inner module (the one used in classification.py) is implemented here.
    print("KERNEL_OK")
</pallas_src>

<mosaic_0001>
module attributes {stable_mosaic.version = 11 : i64} {
  func.func @_td_linear_kernel_single_k(%arg0: i32, %arg1: i32, %arg2: memref<16x128xbf16, #tpu.memory_space<vmem>>, %arg3: memref<128x128xbf16, #tpu.memory_space<vmem>>, %arg4: memref<1x128xf32, #tpu.memory_space<vmem>>, %arg5: memref<16x128xf32, #tpu.memory_space<vmem>>) attributes {dimension_semantics = [#tpu.dimension_semantics<parallel>, #tpu.dimension_semantics<parallel>], iteration_bounds = array<i64: 1, 1>, scalar_prefetch = 0 : i64, scratch_operands = 0 : i64, tpu.core_type = #tpu.core_type<tc>, window_params = [{transform_indices = @transform_0, window_bounds = array<i64: 16, 128>}, {transform_indices = @transform_1, window_bounds = array<i64: 128, 128>}, {transform_indices = @transform_2, window_bounds = array<i64: 1, 128>}, {transform_indices = @transform_3, window_bounds = array<i64: 16, 128>}]} {
    %c0 = arith.constant 0 : index
    %c0_0 = arith.constant 0 : index
    %0 = vector.load %arg2[%c0, %c0_0] : memref<16x128xbf16, #tpu.memory_space<vmem>>, vector<16x128xbf16>
    %c0_1 = arith.constant 0 : index
    %c0_2 = arith.constant 0 : index
    %1 = vector.load %arg3[%c0_1, %c0_2] : memref<128x128xbf16, #tpu.memory_space<vmem>>, vector<128x128xbf16>
    %cst = arith.constant dense<0.000000e+00> : vector<16x128xf32>
    %2 = tpu.matmul %0, %1, %cst {dimension_numbers = #tpu.dot_dimension_numbers<[1], [0], [0], [1], [0, 0, 1, 1], [], []>} : vector<16x128xbf16>, vector<128x128xbf16>, vector<16x128xf32> -> vector<16x128xf32>
    %c0_3 = arith.constant 0 : index
    %c0_4 = arith.constant 0 : index
    %3 = vector.load %arg4[%c0_3, %c0_4] : memref<1x128xf32, #tpu.memory_space<vmem>>, vector<1x128xf32>
    %4 = vector.broadcast %3 : vector<1x128xf32> to vector<16x128xf32>
    %5 = arith.addf %2, %4 : vector<16x128xf32>
    %c0_5 = arith.constant 0 : index
    %c0_6 = arith.constant 0 : index
    %6 = vector.load %arg5[%c0_5, %c0_6] : memref<16x128xf32, #tpu.memory_space<vmem>>, vector<16x128xf32>
    tpu.vector_store %arg5[%c0_5, %c0_6], %5 {strides = array<i32>} : memref<16x128xf32, #tpu.memory_space<vmem>>, vector<16x128xf32>,
    return
  }
  func.func @transform_0(%arg0: i32, %arg1: i32) -> (i32, i32) {
    %c0_i32 = arith.constant 0 : i32
    %c0_i32_0 = arith.constant 0 : i32
    return %arg0, %c0_i32 : i32, i32
  }
  func.func @transform_1(%arg0: i32, %arg1: i32) -> (i32, i32) {
    %c0_i32 = arith.constant 0 : i32
    %c0_i32_0 = arith.constant 0 : i32
    return %c0_i32, %arg1 : i32, i32
  }
  func.func @transform_2(%arg0: i32, %arg1: i32) -> (i32, i32) {
    %c0_i32 = arith.constant 0 : i32
    %c0_i32_0 = arith.constant 0 : i32
    return %c0_i32, %arg1 : i32, i32
  }
  func.func @transform_3(%arg0: i32, %arg1: i32) -> (i32, i32) {
    %c0_i32 = arith.constant 0 : i32
    return %arg0, %arg1 : i32, i32
  }
}

</mosaic_0001>

<llo_original>
// kernel: time_distributed_linear.1
$region0: #{time_distributed_linear.1}
  #allocation0 [shape = 'u32[]', space=smem, size = 0x4, offset = 0x4, fixed_abs, tag = 'smem constant byte address 0x4 - core index']
  #allocation1 [shape = 'u32[144,128]{1,0:T(1,128)}', space=vmem, size = 0x12000, scoped, tag = 'internal scratch']
  %s0 = inlined_call_operand.vmem [shape: bf16[16,128], index: 0, kind: input, shape index: {}]
  %s1 = inlined_call_operand.vmem [shape: bf16[128,128], index: 1, kind: input, shape index: {}]
  %s2 = inlined_call_operand.vmem [shape: f32[1,128], index: 2, kind: input, shape index: {}]
  %s3 = inlined_call_operand.vmem [shape: f32[16,128], index: 3, kind: output, shape index: {}]
  %s4 = sld [smem:[#allocation0]]
  $region22: #{time_distributed_linear.1} parent=0
    _
  %s6 = ssub.s32 1, %s4
  %s7 = scalar_select 0, %s6, %s4
  // Predicated region
  $region2: #{time_distributed_linear.1} parent=0 // pred_check
    _
  $region3: #{time_distributed_linear.1} parent=0 // pred_check_branch
    %9 = sbr.rel (0) target = $region5
  $region4: #{time_distributed_linear.1} parent=0 // pred_region
    _
  $region5: #{time_distributed_linear.1} parent=0 // pred_fallthru
    _
  // Predicated region
  $region6: #{time_distributed_linear.1} parent=0 // pred_check
    _
  $region7: #{time_distributed_linear.1} parent=0 // pred_check_branch
    %11 = sbr.rel (0) target = $region9
  $region8: #{time_distributed_linear.1} parent=0 // pred_region
    _
  $region9: #{time_distributed_linear.1} parent=0 // pred_fallthru
    _
  // Predicated region
  $region10: #{time_distributed_linear.1} parent=0 // pred_check
    _
  $region11: #{time_distributed_linear.1} parent=0 // pred_check_branch
    %13 = sbr.rel (0) target = $region13
  $region12: #{time_distributed_linear.1} parent=0 // pred_region
    _
  $region13: #{time_distributed_linear.1} parent=0 // pred_fallthru
    _
  %v15 = vld [vmem:[%s0] sm:$0xf]
  %v16 = vld [vmem:[%s0 + $0x4] sm:$0xf]
  %v17 = vld [vmem:[%s1] sm:$0xf]
  %v18 = vld [vmem:[%s1 + $0x4] sm:$0xf]
  %v19 = vld [vmem:[%s1 + $0x8] sm:$0xf]
  %v20 = vld [vmem:[%s1 + $0xc] sm:$0xf]
  %v21 = vld [vmem:[%s1 + $0x10] sm:$0xf]
  %v22 = vld [vmem:[%s1 + $0x14] sm:$0xf]
  %v23 = vld [vmem:[%s1 + $0x18] sm:$0xf]
  %v24 = vld [vmem:[%s1 + $0x1c] sm:$0xf]
  %v25 = vld [vmem:[%s1 + $0x20] sm:$0xf]
  %v26 = vld [vmem:[%s1 + $0x24] sm:$0xf]
  %v27 = vld [vmem:[%s1 + $0x28] sm:$0xf]
  %v28 = vld [vmem:[%s1 + $0x2c] sm:$0xf]
  %v29 = vld [vmem:[%s1 + $0x30] sm:$0xf]
  %v30 = vld [vmem:[%s1 + $0x34] sm:$0xf]
  %v31 = vld [vmem:[%s1 + $0x38] sm:$0xf]
  %v32 = vld [vmem:[%s1 + $0x3c] sm:$0xf]
  %v33 = vld [vmem:[%s2] sm:$0x1]
  %v35 = vlaneseq
  %v36 = vshrl.u32 %v35, 7
  %v37 = vsub.s32 0, %v36
  %v38 = vrot.slane %v33, %v37
  %v42 = vunpack.c.l.b16 %v15
  %v43 = vunpack.c.l.b16 %v16
  %v44 = vpack.c.b16 %v43, %v42
  %v62 = vunpack.c.l.b16 %v17
  %v63 = vunpack.c.l.b16 %v18
  %v64 = vunpack.c.l.b16 %v19
  %v65 = vunpack.c.l.b16 %v20
  %v66 = vunpack.c.l.b16 %v21
  %v67 = vunpack.c.l.b16 %v22
  %v68 = vunpack.c.l.b16 %v23
  %v69 = vunpack.c.l.b16 %v24
  %v70 = vunpack.c.l.b16 %v25
  %v71 = vunpack.c.l.b16 %v26
  %v72 = vunpack.c.l.b16 %v27
  %v73 = vunpack.c.l.b16 %v28
  %v74 = vunpack.c.l.b16 %v29
  %v75 = vunpack.c.l.b16 %v30
  %v76 = vunpack.c.l.b16 %v31
  %v77 = vunpack.c.l.b16 %v32
  %v78 = vpack.c.b16 %v63, %v62
  %v79 = vpack.c.b16 %v65, %v64
  %v80 = vpack.c.b16 %v67, %v66
  %v81 = vpack.c.b16 %v69, %v68
  %v82 = vpack.c.b16 %v71, %v70
  %v83 = vpack.c.b16 %v73, %v72
  %v84 = vpack.c.b16 %v75, %v74
  %v85 = vpack.c.b16 %v77, %v76
  %94 = vmatprep.subr.bf16.mxu0 0
  %95 = vmatpush1.bf16.msra.mxu0 %v85
  %96 = vmatprep.subr.bf16.mxu0 0
  %97 = vmatpush1.bf16.msra.mxu0 %v84
  %98 = vmatprep.subr.bf16.mxu0 0
  %99 = vmatpush1.bf16.msra.mxu0 %v83
  %100 = vmatprep.subr.bf16.mxu0 0
  %101 = vmatpush1.bf16.msra.mxu0 %v82
  %102 = vmatprep.subr.bf16.mxu0 0
  %103 = vmatpush1.bf16.msra.mxu0 %v81
  %104 = vmatprep.subr.bf16.mxu0 0
  %105 = vmatpush1.bf16.msra.mxu0 %v80
  %106 = vmatprep.subr.bf16.mxu0 0
  %107 = vmatpush1.bf16.msra.mxu0 %v79
  %108 = vmatprep.subr.bf16.mxu0 0
  %109 = vmatpush1.bf16.msra.mxu0 %v78
  %110 = vmatprep.subr.bf16.mxu0 0
  %111 = vmatpush2.bf16.msra.mxu0 0
  %112 = vmatprep.subr.bf16.mxu0 0
  %113 = vmatpush2.bf16.msra.mxu0 0
  %114 = vmatprep.subr.bf16.mxu0 0
  %115 = vmatpush2.bf16.msra.mxu0 0
  %116 = vmatprep.subr.bf16.mxu0 0
  %117 = vmatpush2.bf16.msra.mxu0 0
  %118 = vmatprep.subr.bf16.mxu0 0
  %119 = vmatpush2.bf16.msra.mxu0 0
  %120 = vmatprep.subr.bf16.mxu0 0
  %121 = vmatpush2.bf16.msra.mxu0 0
  %122 = vmatprep.subr.bf16.mxu0 0
  %123 = vmatpush2.bf16.msra.mxu0 0
  %124 = vmatprep.subr.bf16.mxu0 0
  %125 = vmatpush2.bf16.msra.mxu0 0
  %126 = vmatprep.mubr.bf16.mxu0 0
  %127 = vmatmul.mubr.bf16.gmra.mxu0 %v44
  %v128 = vpop.f32.mrf.mxu0
  %v129 = vadd.f32 %v38, %v128
  %v130 = vpop.f32.mrf.mxu0
  %v131 = vpop.f32.mrf.mxu0
  %v132 = vadd.f32 %v38, %v131
  %v133 = vpop.f32.mrf.mxu0
  %134 = vdwg.mxu0
  %135 = vst [vmem:[%s3] sm:$0xff] %v129
  %136 = vst [vmem:[%s3 + $0x8] sm:$0xff] %v132
  // Predicated region
  $region14: #{time_distributed_linear.1} parent=0 // pred_check
    _
  $region15: #{time_distributed_linear.1} parent=0 // pred_check_branch
    %138 = sbr.rel (0) target = $region17
  $region16: #{time_distributed_linear.1} parent=0 // pred_region
    _
  $region17: #{time_distributed_linear.1} parent=0 // pred_fallthru
    _
  // Predicated region
  $region18: #{time_distributed_linear.1} parent=0 // pred_check
    _
  $region19: #{time_distributed_linear.1} parent=0 // pred_check_branch
    %140 = sbr.rel (0) target = $region21
  $region20: #{time_distributed_linear.1} parent=0 // pred_region
    _
  $region21: #{time_distributed_linear.1} parent=0 // pred_fallthru
    _

</llo_original>
